<compile_context>
chip_gen: v7x
topology: tpu7x:2x2x1
jax: 0.10.0
libtpu: 0.0.40
codegen_flags: <defaults>
</compile_context>

<pallas_src>
import functools

import jax
import jax.numpy as jnp
import numpy as np
from jax.experimental import pallas as pl
from jax.experimental.pallas import tpu as pltpu


def _round_up(x, m):
    return (x + m - 1) // m * m


def _vmem_capacity_bytes():
    """Physical VMEM per core (64 MiB on v7x, 128 MiB on v5e/v6e); safe fallback."""
    try:
        cap = getattr(pltpu.get_tpu_info(), "vmem_capacity_bytes", None)
        if cap:
            return int(cap)
    except Exception:
        pass
    return 128 * 1024 * 1024


def _pick_tiles(n, c, hw, target_bytes):
    """Choose (nb, t_hw): batch-block and spatial lane-tile.

    Sized so one padded-f32 x tile (nb, round_up(c,8), round_up(t_hw,128)) is close to
    `target_bytes` (big enough to amortize the ~0.35us per-grid-step pipeline overhead,
    small enough that double-buffered in+out tiles + f32 temporaries fit the VMEM budget).
    """
    c_pad = _round_up(c, 8)                       # sublane padding (kernel computes in f32)
    hw_pad = _round_up(hw, 128)
    row_bytes = c_pad * hw_pad * 4                # one batch element, full spatial row
    if row_bytes <= target_bytes:
        # Full spatial row per step; block as many whole batch elements as fit.
        nb_cap = max(1, target_bytes // row_bytes)
        nb = 1
        for d in range(1, n + 1):
            if n % d == 0 and d <= nb_cap:
                nb = d
        return nb, hw
    # One batch element per step; tile the spatial axis in multiples of 128.
    t_cap = max(128, ((target_bytes // (c_pad * 4)) // 128) * 128)
    t = t_cap
    while t >= 128:
        if hw % t == 0:
            return 1, t
        t -= 128
    return 1, hw   # no 128-multiple divisor: keep the row whole (still layout-legal)


def _fused_kernel(x_ref, y_ref, s_ref, t_ref, logdet_ref, *, hw_scale, total_count):
    """VMEM-resident fast path: stats + affine in a single pass over resident x."""
    x = x_ref[...].astype(jnp.float32)                                            # (N, C, HW)
    xsum = jnp.sum(jnp.sum(x, axis=2, keepdims=True), axis=0, keepdims=True)      # (1, C, 1)
    mean = xsum * (1.0 / total_count)
    xc = x - mean
    m2 = jnp.sum(jnp.sum(xc * xc, axis=2, keepdims=True), axis=0, keepdims=True)  # (1, C, 1)
    var = m2 * (1.0 / (total_count - 1.0))        # unbiased (Bessel), like torch .std()
    s = -jnp.log(jnp.sqrt(var) + 1e-6)            # eps on std, not var
    exp_s = jnp.exp(s)
    t = -mean * exp_s
    y_ref[...] = (x * exp_s + t).astype(y_ref.dtype)
    s_ref[...] = s.reshape(s_ref.shape)
    t_ref[...] = t.reshape(t_ref.shape)
    logdet_ref[...] = (hw_scale * jnp.sum(s)).reshape(1, 1)


def _stats_kernel(x_ref, mean_ref, m2_ref, *, inv_tile_count):
    """Pass 1 (streaming): per-block mean and centered M2, written to this block's own slot.
    Every grid step is independent -> both grid axes are safely 'parallel'."""
    x = x_ref[...].astype(jnp.float32)                                            # (nb, C, T)
    tsum = jnp.sum(jnp.sum(x, axis=2, keepdims=True), axis=0, keepdims=True)      # (1, C, 1)
    tmean = tsum * inv_tile_count
    xc = x - tmean
    tm2 = jnp.sum(jnp.sum(xc * xc, axis=2, keepdims=True), axis=0, keepdims=True)
    mean_ref[...] = tmean.reshape(mean_ref.shape)                                 # (C, 1)
    m2_ref[...] = tm2.reshape(m2_ref.shape)                                       # (C, 1)


def _apply_kernel(exp_s_ref, t_ref, x_ref, y_ref):
    """Pass 2 (streaming): y = x * exp(s) + t; exp_s/t stay VMEM-resident across the grid."""
    x = x_ref[...].astype(jnp.float32)                                            # (nb, C, T)
    y_ref[...] = (x * exp_s_ref[...] + t_ref[...]).astype(y_ref.dtype)


@functools.partial(jax.jit, static_argnames=("force_two_pass",))
def actnorm_forward(z, *, force_two_pass=False):
    """z: [N, C, H, W]. Returns (z_, log_det, s[1,C,1,1], t[1,C,1,1]) matching the torch module."""
    n, c, h, w = z.shape
    hw = h * w
    if n * hw < 2:
        raise ValueError("Data-dependent init needs N*H*W >= 2 (unbiased std).")
    x3 = z.reshape(n, c, hw)                      # pure view of NCHW: no transpose, no HBM pass

    c_pad = _round_up(c, 8)
    hw_pad = _round_up(hw, 128)

    # Per-chip budgets (64 MiB VMEM on v7x vs 128 MiB on v5e/v6e).
    vmem_cap = _vmem_capacity_bytes()
    vmem_limit = int(min(vmem_cap // 2, 64 * 1024 * 1024))       # 32 MiB v7x, 64 MiB v5e/v6e
    target_tile = int(min(4 * 1024 * 1024, vmem_limit // 12))    # ~2.6 MiB v7x, 4 MiB v5e/v6e

    def _params(sem):
        return pltpu.CompilerParams(dimension_semantics=sem, vmem_limit_bytes=vmem_limit)

    # ---------- fused VMEM-resident fast path (one HBM read + one HBM write) ----------
    total_f32_bytes = n * c_pad * hw_pad * 4
    if (not force_two_pass) and total_f32_bytes <= min(4 * 1024 * 1024, vmem_limit // 8):
        fused = functools.partial(_fused_kernel, hw_scale=float(hw), total_count=float(n * hw))
        y3, s2, t2, logdet = pl.pallas_call(
            fused,
            out_shape=(
                jax.ShapeDtypeStruct((n, c, hw), z.dtype),
                jax.ShapeDtypeStruct((c, 1), jnp.float32),
                jax.ShapeDtypeStruct((c, 1), jnp.float32),
                jax.ShapeDtypeStruct((1, 1), jnp.float32),
            ),
            grid=(1,),
            in_specs=[pl.BlockSpec((n, c, hw), lambda i: (0, 0, 0))],
            out_specs=(
                pl.BlockSpec((n, c, hw), lambda i: (0, 0, 0)),
                pl.BlockSpec((c, 1), lambda i: (0, 0)),
                pl.BlockSpec((c, 1), lambda i: (0, 0)),
                pl.BlockSpec((1, 1), lambda i: (0, 0)),
            ),
            compiler_params=_params(("arbitrary",)),
        )(x3)
        return (y3.reshape(n, c, h, w), logdet[0, 0],
                s2.reshape(1, c, 1, 1), t2.reshape(1, c, 1, 1))

    # ---------- two-pass streaming path (large activations) ----------
    nb, t_hw = _pick_tiles(n, c, hw, target_tile)
    gb, gh = n // nb, hw // t_hw
    grid = (gb, gh)

    stats = functools.partial(_stats_kernel, inv_tile_count=1.0 / float(nb * t_hw))

    # Pass 1: independent per-block partial stats (fully parallel grid -> megacore/2-TC OK).
    block_mean, block_m2 = pl.pallas_call(
        stats,
        out_shape=(
            jax.ShapeDtypeStruct((gb, gh, c, 1), jnp.float32),
            jax.ShapeDtypeStruct((gb, gh, c, 1), jnp.float32),
        ),
        grid=grid,
        in_specs=[pl.BlockSpec((nb, c, t_hw), lambda i, j: (i, 0, j))],
        out_specs=(
            pl.BlockSpec((None, None, c, 1), lambda i, j: (i, j, 0, 0)),
            pl.BlockSpec((None, None, c, 1), lambda i, j: (i, j, 0, 0)),
        ),
        compiler_params=_params(("parallel", "parallel")),
    )(x3)

    # Exact equal-count Chan combine + parameter math on tiny (gb*gh, C) arrays (plain XLA).
    bm = block_mean.reshape(-1, c)
    bm2 = block_m2.reshape(-1, c)
    mean = jnp.mean(bm, axis=0)                                              # (C,)
    m2 = jnp.sum(bm2, axis=0) + float(nb * t_hw) * jnp.sum((bm - mean[None, :]) ** 2, axis=0)
    var = m2 / float(n * hw - 1)
    s = -jnp.log(jnp.sqrt(var) + 1e-6)
    exp_s = jnp.exp(s)
    t = -mean * exp_s
    log_det = float(hw) * jnp.sum(s)

    # Pass 2: streaming affine apply; (C,1) scale/shift use constant index_maps -> loaded once.
    # NOTE: input_output_aliases onto z is deliberately omitted (z is not donated by callers,
    # so XLA would insert a defensive copy = an extra full HBM read+write).
    y3 = pl.pallas_call(
        _apply_kernel,
        out_shape=jax.ShapeDtypeStruct((n, c, hw), z.dtype),
        grid=grid,
        in_specs=[
            pl.BlockSpec((c, 1), lambda i, j: (0, 0)),
            pl.BlockSpec((c, 1), lambda i, j: (0, 0)),
            pl.BlockSpec((nb, c, t_hw), lambda i, j: (i, 0, j)),
        ],
        out_specs=pl.BlockSpec((nb, c, t_hw), lambda i, j: (i, 0, j)),
        compiler_params=_params(("parallel", "parallel")),
    )(exp_s.reshape(c, 1), t.reshape(c, 1), x3)

    return (y3.reshape(n, c, h, w), log_det,
            s.reshape(1, c, 1, 1), t.reshape(1, c, 1, 1))


def _actnorm_reference(z):
    """Pure-JAX reference mirroring the torch forward (first call, data-dependent init)."""
    n, c, h, w = z.shape
    m = n * h * w
    mean = jnp.mean(z, axis=(0, 2, 3), keepdims=True)
    var = jnp.sum((z - mean) ** 2, axis=(0, 2, 3), keepdims=True) / (m - 1)
    std = jnp.sqrt(var)
    s = -jnp.log(std + 1e-6)
    t = -mean * jnp.exp(s)
    z_ = z * jnp.exp(s) + t
    log_det = (h * w) * jnp.sum(s)
    return z_, log_det


if __name__ == "__main__":
    key = jax.random.PRNGKey(0)
    N, C, H, W = 2, 4, 16, 16
    # Non-trivial per-channel scale/shift so the data-dependent init does real work.
    z = jax.random.normal(key, (N, C, H, W), dtype=jnp.float32) * 3.0 + 1.5

    z_ref, log_det_ref = _actnorm_reference(z)

    # Fused VMEM-resident fast path (used for this small shape).
    z1, ld1, s1, t1 = actnorm_forward(z)
    # Streaming two-pass path, exercised explicitly so both code paths are validated.
    z2, ld2, s2, t2 = actnorm_forward(z, force_two_pass=True)
    jax.block_until_ready((z1, ld1, s1, t1, z2, ld2, s2, t2))

    for zo, ld in ((z1, ld1), (z2, ld2)):
        np.testing.assert_allclose(np.asarray(zo), np.asarray(z_ref), rtol=1e-5, atol=1e-5)
        np.testing.assert_allclose(np.asarray(ld), np.asarray(log_det_ref), rtol=1e-5, atol=1e-5)

    print("KERNEL_OK")
</pallas_src>

<mosaic_0001>
module attributes {stable_mosaic.version = 11 : i64} {
  func.func @_fused_kernel(%arg0: i32, %arg1: memref<2x4x256xf32, #tpu.memory_space<vmem>>, %arg2: memref<2x4x256xf32, #tpu.memory_space<vmem>>, %arg3: memref<4x1xf32, #tpu.memory_space<vmem>>, %arg4: memref<4x1xf32, #tpu.memory_space<vmem>>, %arg5: memref<1x1xf32, #tpu.memory_space<vmem>>) attributes {dimension_semantics = [#tpu.dimension_semantics<arbitrary>], iteration_bounds = array<i64: 1>, scalar_prefetch = 0 : i64, scratch_operands = 0 : i64, tpu.core_type = #tpu.core_type<tc>, window_params = [{pipeline_mode = #tpu.pipeline_mode<synchronous>, transform_indices = @transform_0, window_bounds = array<i64: 2, 4, 256>}, {pipeline_mode = #tpu.pipeline_mode<synchronous>, transform_indices = @transform_1, window_bounds = array<i64: 2, 4, 256>}, {pipeline_mode = #tpu.pipeline_mode<synchronous>, transform_indices = @transform_2, window_bounds = array<i64: 4, 1>}, {pipeline_mode = #tpu.pipeline_mode<synchronous>, transform_indices = @transform_3, window_bounds = array<i64: 4, 1>}, {pipeline_mode = #tpu.pipeline_mode<synchronous>, transform_indices = @transform_4, window_bounds = array<i64: 1, 1>}]} {
    %c0 = arith.constant 0 : index
    %c0_0 = arith.constant 0 : index
    %c0_1 = arith.constant 0 : index
    %0 = vector.load %arg1[%c0, %c0_0, %c0_1] : memref<2x4x256xf32, #tpu.memory_space<vmem>>, vector<2x4x256xf32>
    %cst = arith.constant dense<0.000000e+00> : vector<2x4xf32>
    %1 = vector.multi_reduction <add>, %0, %cst [2] : vector<2x4x256xf32> to vector<2x4xf32>
    %2 = vector.shape_cast %1 : vector<2x4xf32> to vector<2x4x1xf32>
    %cst_2 = arith.constant dense<0.000000e+00> : vector<4x1xf32>
    %3 = vector.multi_reduction <add>, %2, %cst_2 [0] : vector<2x4x1xf32> to vector<4x1xf32>
    %4 = vector.shape_cast %3 : vector<4x1xf32> to vector<1x4x1xf32>
    %cst_3 = arith.constant 0.001953125 : f32
    %5 = vector.broadcast %cst_3 : f32 to vector<1x4x1xf32>
    %6 = arith.mulf %4, %5 : vector<1x4x1xf32>
    %7 = vector.broadcast %6 : vector<1x4x1xf32> to vector<2x4x256xf32>
    %8 = arith.subf %0, %7 : vector<2x4x256xf32>
    %9 = arith.mulf %8, %8 : vector<2x4x256xf32>
    %cst_4 = arith.constant dense<0.000000e+00> : vector<2x4xf32>
    %10 = vector.multi_reduction <add>, %9, %cst_4 [2] : vector<2x4x256xf32> to vector<2x4xf32>
    %11 = vector.shape_cast %10 : vector<2x4xf32> to vector<2x4x1xf32>
    %cst_5 = arith.constant dense<0.000000e+00> : vector<4x1xf32>
    %12 = vector.multi_reduction <add>, %11, %cst_5 [0] : vector<2x4x1xf32> to vector<4x1xf32>
    %13 = vector.shape_cast %12 : vector<4x1xf32> to vector<1x4x1xf32>
    %cst_6 = arith.constant 0.00195694715 : f32
    %14 = vector.broadcast %cst_6 : f32 to vector<1x4x1xf32>
    %15 = arith.mulf %13, %14 : vector<1x4x1xf32>
    %16 = math.sqrt %15 : vector<1x4x1xf32>
    %cst_7 = arith.constant 9.99999997E-7 : f32
    %17 = vector.broadcast %cst_7 : f32 to vector<1x4x1xf32>
    %18 = arith.addf %16, %17 : vector<1x4x1xf32>
    %19 = math.log %18 : vector<1x4x1xf32>
    %cst_8 = arith.constant 0.000000e+00 : f32
    %20 = vector.broadcast %cst_8 : f32 to vector<1x4x1xf32>
    %21 = arith.subf %20, %19 : vector<1x4x1xf32>
    %22 = math.exp %21 : vector<1x4x1xf32>
    %cst_9 = arith.constant 0.000000e+00 : f32
    %23 = vector.broadcast %cst_9 : f32 to vector<1x4x1xf32>
    %24 = arith.subf %23, %6 : vector<1x4x1xf32>
    %25 = arith.mulf %24, %22 : vector<1x4x1xf32>
    %26 = vector.broadcast %22 : vector<1x4x1xf32> to vector<2x4x256xf32>
    %27 = arith.mulf %0, %26 : vector<2x4x256xf32>
    %28 = vector.broadcast %25 : vector<1x4x1xf32> to vector<2x4x256xf32>
    %29 = arith.addf %27, %28 : vector<2x4x256xf32>
    %c0_10 = arith.constant 0 : index
    %c0_11 = arith.constant 0 : index
    %c0_12 = arith.constant 0 : index
    %30 = vector.load %arg2[%c0_10, %c0_11, %c0_12] : memref<2x4x256xf32, #tpu.memory_space<vmem>>, vector<2x4x256xf32>
    tpu.vector_store %arg2[%c0_10, %c0_11, %c0_12], %29 {strides = array<i32>} : memref<2x4x256xf32, #tpu.memory_space<vmem>>, vector<2x4x256xf32>,
    %31 = vector.shape_cast %21 : vector<1x4x1xf32> to vector<4x1xf32>
    %c0_13 = arith.constant 0 : index
    %c0_14 = arith.constant 0 : index
    %32 = vector.load %arg3[%c0_13, %c0_14] : memref<4x1xf32, #tpu.memory_space<vmem>>, vector<4x1xf32>
    tpu.vector_store %arg3[%c0_13, %c0_14], %31 {strides = array<i32>} : memref<4x1xf32, #tpu.memory_space<vmem>>, vector<4x1xf32>,
    %33 = vector.shape_cast %25 : vector<1x4x1xf32> to vector<4x1xf32>
    %c0_15 = arith.constant 0 : index
    %c0_16 = arith.constant 0 : index
    %34 = vector.load %arg4[%c0_15, %c0_16] : memref<4x1xf32, #tpu.memory_space<vmem>>, vector<4x1xf32>
    tpu.vector_store %arg4[%c0_15, %c0_16], %33 {strides = array<i32>} : memref<4x1xf32, #tpu.memory_space<vmem>>, vector<4x1xf32>,
    %35 = vector.shape_cast %21 : vector<1x4x1xf32> to vector<1x1x4x1xf32>
    %cst_17 = arith.constant dense<0.000000e+00> : vector<1xf32>
    %36 = vector.multi_reduction <add>, %35, %cst_17 [1, 2, 3] : vector<1x1x4x1xf32> to vector<1xf32>
    %37 = vector.shape_cast %36 : vector<1xf32> to vector<1x1x1x1xf32>
    %38 = vector.extract %37[0, 0, 0, 0] : f32 from vector<1x1x1x1xf32>
    %cst_18 = arith.constant 2.560000e+02 : f32
    %39 = arith.mulf %cst_18, %38 : f32
    %40 = vector.broadcast %39 : f32 to vector<1x1xf32>
    %c0_19 = arith.constant 0 : index
    %c0_20 = arith.constant 0 : index
    %41 = vector.load %arg5[%c0_19, %c0_20] : memref<1x1xf32, #tpu.memory_space<vmem>>, vector<1x1xf32>
    tpu.vector_store %arg5[%c0_19, %c0_20], %40 {strides = array<i32>} : memref<1x1xf32, #tpu.memory_space<vmem>>, vector<1x1xf32>,
    return
  }
  func.func @transform_0(%arg0: i32) -> (i32, i32, i32) {
    %c0_i32 = arith.constant 0 : i32
    %c0_i32_0 = arith.constant 0 : i32
    %c0_i32_1 = arith.constant 0 : i32
    %c0_i32_2 = arith.constant 0 : i32
    return %c0_i32, %c0_i32_0, %c0_i32_1 : i32, i32, i32
  }
  func.func @transform_1(%arg0: i32) -> (i32, i32, i32) {
    %c0_i32 = arith.constant 0 : i32
    %c0_i32_0 = arith.constant 0 : i32
    %c0_i32_1 = arith.constant 0 : i32
    %c0_i32_2 = arith.constant 0 : i32
    return %c0_i32, %c0_i32_0, %c0_i32_1 : i32, i32, i32
  }
  func.func @transform_2(%arg0: i32) -> (i32, i32) {
    %c0_i32 = arith.constant 0 : i32
    %c0_i32_0 = arith.constant 0 : i32
    %c0_i32_1 = arith.constant 0 : i32
    return %c0_i32, %c0_i32_0 : i32, i32
  }
  func.func @transform_3(%arg0: i32) -> (i32, i32) {
    %c0_i32 = arith.constant 0 : i32
    %c0_i32_0 = arith.constant 0 : i32
    %c0_i32_1 = arith.constant 0 : i32
    return %c0_i32, %c0_i32_0 : i32, i32
  }
  func.func @transform_4(%arg0: i32) -> (i32, i32) {
    %c0_i32 = arith.constant 0 : i32
    %c0_i32_0 = arith.constant 0 : i32
    %c0_i32_1 = arith.constant 0 : i32
    return %c0_i32, %c0_i32_0 : i32, i32
  }
}

</mosaic_0001>

<llo_original>
// kernel: actnorm_forward.1
$region0: #{actnorm_forward.1}
  #allocation0 [shape = 'u32[]', space=smem, size = 0x4, offset = 0x4, fixed_abs, tag = 'smem constant byte address 0x4 - core index']
  #allocation1 [shape = 'u32[144,128]{1,0:T(1,128)}', space=vmem, size = 0x12000, scoped, tag = 'internal scratch']
  %s0 = inlined_call_operand.hbm [shape: f32[2,4,256], index: 0, kind: input, shape index: {}]
  %s1 = inlined_call_operand.hbm [shape: f32[2,4,256], index: 1, kind: output, shape index: {0}]
  %s2 = inlined_call_operand.hbm [shape: f32[4,1], index: 2, kind: output, shape index: {1}]
  %s3 = inlined_call_operand.hbm [shape: f32[4,1], index: 3, kind: output, shape index: {2}]
  %s4 = inlined_call_operand.hbm [shape: f32[1,1], index: 4, kind: output, shape index: {3}]
  %5 = xla_tuple %s1, %s2, %s3, %s4
  %s6 = sld [smem:[#allocation0]]
  $region42: #{actnorm_forward.1} parent=0
    _
  %s8 = ssub.s32 1, %s6
  %s9 = scalar_select 0, %s8, %s6
  $region1: #{actnorm_forward.1} parent=0
    #allocation2 [shape = 'u8[8192]{0}', space=vmem, size = 0x2000, scoped, tag = 'input window, operand 0, single buffered']
    #allocation3 [shape = 's32[1]{0}', space=sflag, size = 0x4, scoped, tag = 'scoped memory for actnorm_forward.1']
    #allocation4 [shape = 's32[1]{0}', space=sflag, size = 0x4, scoped, tag = 'scoped memory for actnorm_forward.1']
    #allocation5 [shape = 'u8[8192]{0}', space=vmem, size = 0x2000, scoped, tag = 'output window, operand 0, single buffered']
    #allocation6 [shape = 'u8[2048]{0}', space=vmem, size = 0x800, scoped, tag = 'output window, operand 1, single buffered']
    #allocation7 [shape = 's32[1]{0}', space=sflag, size = 0x4, scoped, tag = 'scoped memory for actnorm_forward.1']
    #allocation8 [shape = 'u8[2048]{0}', space=vmem, size = 0x800, scoped, tag = 'output window, operand 2, single buffered']
    #allocation9 [shape = 'u8[512]{0}', space=vmem, size = 0x400, scoped, tag = 'output window, operand 3, single buffered']
    #allocation10 [shape = 's32[1]{0}', space=sflag, size = 0x4, scoped, tag = 'scoped memory for actnorm_forward.1']
    %10 = vsyncpa [#allocation3], 0
    %11 = vsyncpa [#allocation4], 0
    %12 = vsyncpa [#allocation7], 0
    %13 = vsyncpa [#allocation10], 0
    // Predicated region
    $region2: #{actnorm_forward.1} parent=1 // pred_check
      _
    $region3: #{actnorm_forward.1} parent=1 // pred_check_branch
      %15 = sbr.rel (0) target = $region5
    $region4: #{actnorm_forward.1} parent=1 // pred_region
      %s17 = ssub.s32 256, 256
      %18 = vsyncadd [#allocation3], %s17
      %s19 = sshll.u32 [#allocation2], 4
      %s20 = int_to_ptr.vmem [resolvable:$true] %s19
      %25 = dma.hbm_to_vmem [thread:$0]  %s0, 256, %s20, [#allocation3], 128, 128, 8
    $region5: #{actnorm_forward.1} parent=1 // pred_fallthru
      _
    // Predicated region
    $region6: #{actnorm_forward.1} parent=1 // pred_check
      _
    $region7: #{actnorm_forward.1} parent=1 // pred_check_branch
      %27 = sbr.rel (0) target = $region9
    $region8: #{actnorm_forward.1} parent=1 // pred_region
      %28 = dma.done [#allocation3], 256
    $region9: #{actnorm_forward.1} parent=1 // pred_fallthru
      _
    %v29 = vld [vmem:[#allocation2] sm:$0xff]
    %v30 = vld [vmem:[#allocation2 + $0x8] sm:$0xff]
    %v33 = vcombine.high %v29, %v29
    %v34 = vcombine.high %v30, %v30
    %vm37 = vcmask 1043456
    %v38 = vsel %vm37, %v29, 0.0
    %v39 = vsel %vm37, %v33, 0.0
    %v40 = vadd.f32 %v38, %v39
    %41 = vadd.xlane.f32.xlu0 %v40
    %v42 = vpop.xlane.xlu0 %41
    %v43 = vsel %vm37, %v30, 0.0
    %v44 = vsel %vm37, %v34, 0.0
    %v45 = vadd.f32 %v43, %v44
    %46 = vadd.xlane.f32.xlu0 %v45
    %v47 = vpop.xlane.xlu0 %46
    %v48 = vsel %vm37, %v42, 0.0
    %v49 = vsel %vm37, %v47, 0.0
    %v50 = vadd.f32 %v48, %v49
    %v51 = vmul.f32 %v50, 0.001953125
    %v54 = vunpack.c.l.s4 839922192
    %v55 = vunpack.c.0.s8 %v54
    %v56 = vlaneseq
    %v57 = vshrl.u32 %v56, 7
    %v58 = vsub.s32 %v55, %v57
    %v59 = vrot.slane %v51, %v58
    %v61 = vsub.f32 %v29, %v59
    %v62 = vsub.f32 %v30, %v59
    %v63 = vmul.f32 %v61, %v61
    %v64 = vmul.f32 %v62, %v62
    %v67 = vcombine.high %v63, %v63
    %v68 = vcombine.high %v64, %v64
    %v71 = vsel %vm37, %v63, 0.0
    %v72 = vsel %vm37, %v67, 0.0
    %v73 = vadd.f32 %v71, %v72
    %74 = vadd.xlane.f32.xlu0 %v73
    %v75 = vpop.xlane.xlu0 %74
    %v76 = vsel %vm37, %v64, 0.0
    %v77 = vsel %vm37, %v68, 0.0
    %v78 = vadd.f32 %v76, %v77
    %79 = vadd.xlane.f32.xlu0 %v78
    %v80 = vpop.xlane.xlu0 %79
    %v81 = vsel %vm37, %v75, 0.0
    %v82 = vsel %vm37, %v80, 0.0
    %v83 = vadd.f32 %v81, %v82
    %v84 = vmul.f32 %v83, 0.0019569471
    %v85 = vrsqrt.pop %v84
    %v86 = vmul.f32 %v84, %v85
    %vm87 = vcmp.eq.f32.partialorder %v84, inf
    %v88 = vsel %vm87, %v84, %v86
    %vm89 = vcmp.eq.f32.partialorder %v84, 0.0
    %v90 = vand.u32 %v84, 2147483648
    %v91 = vsel %vm89, %v90, %v88
    %v92 = vadd.f32 %v91, 1e-06
    %v93 = vlog2.pop %v92
    %v94 = vmul.f32 %v93, 0.6931472
    %v95 = vsub.f32 0.0, %v94
    %v96 = vmul.f32 %v95, 1.442695
    %v97 = vpow.pop %v96
    %v98 = vsub.f32 0.0, %v51
    %v99 = vmul.f32 %v98, %v97
    %v102 = vunpack.c.l.s4 839922192
    %v103 = vunpack.c.0.s8 %v102
    %v104 = vlaneseq
    %v105 = vshrl.u32 %v104, 7
    %v106 = vsub.s32 %v103, %v105
    %v107 = vrot.slane %v97, %v106
    %v109 = vmul.f32 %v29, %v107
    %v110 = vmul.f32 %v30, %v107
    %v113 = vunpack.c.l.s4 839922192
    %v114 = vunpack.c.0.s8 %v113
    %v115 = vlaneseq
    %v116 = vshrl.u32 %v115, 7
    %v117 = vsub.s32 %v114, %v116
    %v118 = vrot.slane %v99, %v117
    %v120 = vadd.f32 %v109, %v118
    %v121 = vadd.f32 %v110, %v118
    %122 = vst [vmem:[#allocation5] sm:$0xff] %v120
    %123 = vst [vmem:[#allocation5 + $0x8] sm:$0xff] %v121
    %vm124 = vcmask 3072
    %125 = vst.msk [vmem:[#allocation6] sm:$0xf] %vm124, %v95
    %126 = vst.msk [vmem:[#allocation8] sm:$0xf] %vm124, %v99
    %v127 = vsel %vm124, %v95, 0.0
    %128 = vadd.xlane.f32.xlu0 %v127
    %v129 = vpop.xlane.xlu0 %128
    %v130 = vrot.slane %v129, 4
    %v131 = vadd.f32 %v129, %v130
    %v132 = vrot.slane %v131, 2
    %v133 = vadd.f32 %v131, %v132
    %v134 = vrot.slane %v133, 1
    %v135 = vadd.f32 %v133, %v134
    %s136 = vtos %v135
    %s137 = smul.f32 %s136, 256.0
    %v138 = vstv %s137
    %vm139 = vcmask 0
    %140 = vst.msk [vmem:[#allocation9] sm:$0x1] %vm139, %v138
    // Predicated region
    $region10: #{actnorm_forward.1} parent=1 // pred_check
      _
    $region11: #{actnorm_forward.1} parent=1 // pred_check_branch
      %142 = sbr.rel (0) target = $region13
    $region12: #{actnorm_forward.1} parent=1 // pred_region
      %s144 = ssub.s32 256, 256
      %145 = vsyncadd [#allocation4], %s144
      %s146 = sshll.u32 [#allocation5], 4
      %s147 = int_to_ptr.vmem [resolvable:$true] %s146
      %152 = dma.vmem_to_hbm [thread:$0]  %s147, 256, %s1, [#allocation4], 128, 128, 8
    $region13: #{actnorm_forward.1} parent=1 // pred_fallthru
      _
    // Predicated region
    $region14: #{actnorm_forward.1} parent=1 // pred_check
      _
    $region15: #{actnorm_forward.1} parent=1 // pred_check_branch
      %154 = sbr.rel (0) target = $region17
    $region16: #{actnorm_forward.1} parent=1 // pred_region
      %s156 = ssub.s32 64, 64
      %157 = vsyncadd [#allocation7], %s156
      %s159 = sshll.u32 [#allocation6], 4
      %s160 = int_to_ptr.vmem [resolvable:$true] %s159
      %162 = dma.vmem_to_hbm [thread:$0]  %s160, 64, %s2, [#allocation7]
    $region17: #{actnorm_forward.1} parent=1 // pred_fallthru
      _
    // Predicated region
    $region18: #{actnorm_forward.1} parent=1 // pred_check
      _
    $region19: #{actnorm_forward.1} parent=1 // pred_check_branch
      %164 = sbr.rel (0) target = $region21
    $region20: #{actnorm_forward.1} parent=1 // pred_region
      %s166 = ssub.s32 64, 64
      %167 = vsyncadd [#allocation7], %s166
      %s169 = sshll.u32 [#allocation8], 4
      %s170 = int_to_ptr.vmem [resolvable:$true] %s169
      %172 = dma.vmem_to_hbm [thread:$0]  %s170, 64, %s3, [#allocation7]
    $region21: #{actnorm_forward.1} parent=1 // pred_fallthru
      _
    // Predicated region
    $region22: #{actnorm_forward.1} parent=1 // pred_check
      _
    $region23: #{actnorm_forward.1} parent=1 // pred_check_branch
      %174 = sbr.rel (0) target = $region25
    $region24: #{actnorm_forward.1} parent=1 // pred_region
      %s176 = ssub.s32 16, 16
      %177 = vsyncadd [#allocation10], %s176
      %s179 = sshll.u32 [#allocation9], 4
      %s180 = int_to_ptr.vmem [resolvable:$true] %s179
      %182 = dma.vmem_to_hbm [thread:$0]  %s180, 16, %s4, [#allocation10]
    $region25: #{actnorm_forward.1} parent=1 // pred_fallthru
      _
    // Predicated region
    $region26: #{actnorm_forward.1} parent=1 // pred_check
      _
    $region27: #{actnorm_forward.1} parent=1 // pred_check_branch
      %184 = sbr.rel (0) target = $region29
    $region28: #{actnorm_forward.1} parent=1 // pred_region
      %185 = dma.done [#allocation4], 256
    $region29: #{actnorm_forward.1} parent=1 // pred_fallthru
      _
    // Predicated region
    $region30: #{actnorm_forward.1} parent=1 // pred_check
      _
    $region31: #{actnorm_forward.1} parent=1 // pred_check_branch
      %187 = sbr.rel (0) target = $region33
    $region32: #{actnorm_forward.1} parent=1 // pred_region
      %188 = dma.done [#allocation7], 64
    $region33: #{actnorm_forward.1} parent=1 // pred_fallthru
      _
    // Predicated region
    $region34: #{actnorm_forward.1} parent=1 // pred_check
      _
    $region35: #{actnorm_forward.1} parent=1 // pred_check_branch
      %190 = sbr.rel (0) target = $region37
    $region36: #{actnorm_forward.1} parent=1 // pred_region
      %191 = dma.done [#allocation7], 64
    $region37: #{actnorm_forward.1} parent=1 // pred_fallthru
      _
    // Predicated region
    $region38: #{actnorm_forward.1} parent=1 // pred_check
      _
    $region39: #{actnorm_forward.1} parent=1 // pred_check_branch
      %193 = sbr.rel (0) target = $region41
    $region40: #{actnorm_forward.1} parent=1 // pred_region
      %194 = dma.done [#allocation10], 16
    $region41: #{actnorm_forward.1} parent=1 // pred_fallthru
      _
    %195 = vsyncpa [#allocation3], 1
    %196 = vsyncpa [#allocation4], 1
    %197 = vsyncpa [#allocation7], 1
    %198 = vsyncpa [#allocation10], 1

</llo_original>
